<compile_context>
chip_gen: v7x
topology: tpu7x:2x2x1
jax: 0.10.0
libtpu: 0.0.40
codegen_flags: <defaults>
</compile_context>

<pallas_src>
import functools

import numpy as np
import jax
import jax.numpy as jnp
from jax import lax
from jax.experimental import pallas as pl
from jax.experimental.pallas import tpu as pltpu

NEG_FILL = -1e-9  # value used by the PyTorch module for both mask and padding


def _round_up(x, m):
    return ((x + m - 1) // m) * m


def _choose_query_tiling(nq):
    """Return (tq, nq_padded): sublane-aligned query tile + padded query count."""
    nq8 = _round_up(nq, 8)
    for t in (512, 256, 128):          # prefer big, evenly dividing tiles
        if nq8 % t == 0:
            return t, nq8
    if nq8 <= 512:
        return nq8, nq8                # single (aligned) block per batch
    t = 256                            # otherwise pad to a 256-tile sweet spot
    return t, _round_up(nq8, t)


def _contrastive_kernel(scale_ref, x_ref, y_ref, mask_ref, out_ref, y_cache,
                        *, norm, matmul_dtype):
    """One grid step = (batch b, query tile q).

    scale_ref: (1,) f32 SMEM        (exp(logit_scale) when norm=True, else 1.0)
    x_ref:     (1, tq, d)  VMEM
    y_ref:     (1, L,  d)  VMEM     (support padded to L = multiple of 128)
    mask_ref:  (1, 1,  L)  VMEM i32 (nonzero -> NEG_FILL; pad columns already 1)
    out_ref:   (1, tq, L)  VMEM
    y_cache:   (L, d) matmul_dtype VMEM scratch (normalized y, reused across q)
    """
    if norm:
        # y is identical for every q tile of a batch: normalize + cast it once
        # per batch (q == 0) into the persistent scratch.
        @pl.when(pl.program_id(1) == 0)
        def _():
            y = y_ref[0].astype(jnp.float32)
            inv = lax.rsqrt(
                jnp.maximum(jnp.sum(y * y, axis=-1, keepdims=True), 1e-24))
            y_cache[...] = (y * inv).astype(matmul_dtype)

        x = x_ref[0].astype(jnp.float32)
        inv = lax.rsqrt(
            jnp.maximum(jnp.sum(x * x, axis=-1, keepdims=True), 1e-24))
        # Fold exp(logit_scale) into the (tq, d) operand, not the (tq, L) result.
        x = (x * (scale_ref[0] * inv)).astype(matmul_dtype)
        y_mm = y_cache[...]
    else:
        # No normalization: cast straight to the matmul dtype (no f32 round-trip).
        x = x_ref[0].astype(matmul_dtype)
        y_mm = y_ref[0].astype(matmul_dtype)

    # (tq, d) x (L, d) contracted on d -> (tq, L); no explicit transpose.
    res = lax.dot_general(
        x, y_mm,
        dimension_numbers=(((1,), (1,)), ((), ())),
        preferred_element_type=jnp.float32)

    # One select over the lane-dense width covers both masked_fill_ and padding.
    mask = mask_ref[0]                               # (1, L) broadcasts over queries
    out_ref[0] = jnp.where(mask != 0, jnp.float32(NEG_FILL), res).astype(out_ref.dtype)


def contrastive_embed(x, encoded_support, support_token_mask, *,
                      max_support_len=81, norm=False, logit_scale=None,
                      matmul_dtype=jnp.float32, out_dtype=jnp.float32,
                      lane_padded_output=False):
    bs, nq, d = x.shape
    _, ns, _ = encoded_support.shape
    assert ns <= max_support_len

    # Lane-dense padded support width and sublane-aligned query tiling.
    L = _round_up(max_support_len, 128)
    tq, nq_pad = _choose_query_tiling(nq)
    q_steps = nq_pad // tq

    if nq_pad != nq:
        x = jnp.pad(x, ((0, 0), (0, nq_pad - nq), (0, 0)))

    # Pad support columns with zeros; fold token-mask + pad-columns into one mask.
    y_pad = jnp.pad(encoded_support, ((0, 0), (0, L - ns), (0, 0)))
    mask_i32 = jnp.pad(support_token_mask.astype(jnp.int32),
                       ((0, 0), (0, L - ns)), constant_values=1).reshape(bs, 1, L)

    if norm:
        scale = jnp.exp(jnp.asarray(logit_scale, jnp.float32)).reshape(1)
    else:
        scale = jnp.ones((1,), jnp.float32)

    kernel = functools.partial(_contrastive_kernel, norm=norm,
                               matmul_dtype=matmul_dtype)

    in_itemsize = jnp.dtype(x.dtype).itemsize
    out_itemsize = jnp.dtype(out_dtype).itemsize
    mm_itemsize = jnp.dtype(matmul_dtype).itemsize
    cost = pl.CostEstimate(
        flops=2 * bs * nq_pad * L * d,
        transcendentals=(bs * (nq_pad + L)) if norm else 0,
        bytes_accessed=(bs * nq_pad * d * in_itemsize       # x
                        + bs * L * d * in_itemsize          # y (resident across q)
                        + bs * L * 4                        # mask
                        + bs * nq_pad * L * out_itemsize))  # padded output

    # Per-step VMEM estimate (double-buffered x/out; resident y/mask; y cache).
    vmem_est = (2 * tq * d * in_itemsize + L * d * in_itemsize + L * 4
                + 2 * tq * L * out_itemsize + L * d * mm_itemsize)
    vmem_limit = int(vmem_est * 1.5) if vmem_est > (24 << 20) else None

    out_padded = pl.pallas_call(
        kernel,
        out_shape=jax.ShapeDtypeStruct((bs, nq_pad, L), out_dtype),
        grid_spec=pltpu.PrefetchScalarGridSpec(
            num_scalar_prefetch=0,
            grid=(bs, q_steps),
            in_specs=[
                pl.BlockSpec(memory_space=pltpu.MemorySpace.SMEM),        # scale
                pl.BlockSpec((1, tq, d), lambda b, q: (b, q, 0)),          # x
                pl.BlockSpec((1, L, d), lambda b, q: (b, 0, 0)),           # support
                pl.BlockSpec((1, 1, L), lambda b, q: (b, 0, 0)),           # fused mask
            ],
            out_specs=pl.BlockSpec((1, tq, L), lambda b, q: (b, q, 0)),
            scratch_shapes=[pltpu.VMEM((L, d), matmul_dtype)],             # y cache
        ),
        compiler_params=pltpu.CompilerParams(
            # q must be "arbitrary" when the y cache is reused across q steps.
            dimension_semantics=("parallel", "arbitrary" if norm else "parallel"),
            vmem_limit_bytes=vmem_limit),
        cost_estimate=cost,
    )(scale, x, y_pad, mask_i32)

    if lane_padded_output:
        # Perf option: keep the lane-dense support width (cols >= max_support_len
        # already hold NEG_FILL) and let the consumer slice/fuse.
        return out_padded[:, :nq, :] if nq_pad != nq else out_padded
    # Module semantics: (bs, nq, max_support_len).
    return out_padded[:, :nq, :max_support_len]


def _reference(x, y, mask, max_support_len, norm, logit_scale):
    """Pure-JAX f32 reference mirroring the PyTorch forward."""
    xf = x.astype(jnp.float32)
    yf = y.astype(jnp.float32)
    if norm:
        xf = xf / jnp.maximum(jnp.linalg.norm(xf, axis=-1, keepdims=True), 1e-12)
        yf = yf / jnp.maximum(jnp.linalg.norm(yf, axis=-1, keepdims=True), 1e-12)
    res = jnp.einsum("bqd,bkd->bqk", xf, yf, precision=lax.Precision.HIGHEST)
    if norm:
        res = jnp.exp(jnp.float32(logit_scale)) * res
    res = jnp.where(mask[:, None, :], jnp.float32(NEG_FILL), res)
    pad = max_support_len - res.shape[-1]
    return jnp.pad(res, ((0, 0), (0, 0), (0, pad)), constant_values=NEG_FILL)


if __name__ == "__main__":
    # Small shapes consistent with the module's forward:
    #   x: (bs, num_queries, d_model), encoded_support: (bs, n_support, d_model)
    bs, nq, d, ns = 2, 16, 32, 8
    max_support_len = 81

    key = jax.random.PRNGKey(0)
    kx, ky, km = jax.random.split(key, 3)
    x = jax.random.normal(kx, (bs, nq, d), dtype=jnp.float32)
    encoded_support = jax.random.normal(ky, (bs, ns, d), dtype=jnp.float32)
    support_token_mask = jax.random.bernoulli(km, 0.3, (bs, ns))  # True -> masked

    # Deterministic parameter init (module __init__): logit_scale = log(1/0.07)
    logit_scale = float(np.log(1.0 / 0.07))

    ok = True
    for norm in (False, True):
        ref = _reference(x, encoded_support, support_token_mask,
                         max_support_len, norm, logit_scale)
        for mm_dtype, tol in ((jnp.float32, 2e-2), (jnp.bfloat16, 8e-2)):
            out = contrastive_embed(
                x, encoded_support, support_token_mask,
                max_support_len=max_support_len, norm=norm,
                logit_scale=logit_scale, matmul_dtype=mm_dtype)
            out = jax.block_until_ready(out)
            ok = ok and (out.shape == (bs, nq, max_support_len))
            ok = ok and bool(jnp.allclose(out, ref, atol=tol, rtol=tol))

    print("KERNEL_OK" if ok else "MISMATCH")
</pallas_src>

<mosaic_0001>
module attributes {stable_mosaic.version = 11 : i64} {
  func.func @_contrastive_kernel(%arg0: i32, %arg1: i32, %arg2: memref<1xf32, #tpu.memory_space<smem>>, %arg3: memref<1x16x32xf32, #tpu.memory_space<vmem>>, %arg4: memref<1x128x32xf32, #tpu.memory_space<vmem>>, %arg5: memref<1x1x128xi32, #tpu.memory_space<vmem>>, %arg6: memref<1x16x128xf32, #tpu.memory_space<vmem>>, %arg7: memref<128x32xf32, #tpu.memory_space<vmem>>) attributes {dimension_semantics = [#tpu.dimension_semantics<parallel>, #tpu.dimension_semantics<parallel>], iteration_bounds = array<i64: 2, 1>, scalar_prefetch = 0 : i64, scratch_operands = 1 : i64, tpu.core_type = #tpu.core_type<tc>, window_params = [{transform_indices = @transform_0, window_bounds = array<i64: 1>}, {transform_indices = @transform_1, window_bounds = array<i64: 1, 16, 32>}, {transform_indices = @transform_2, window_bounds = array<i64: 1, 128, 32>}, {transform_indices = @transform_3, window_bounds = array<i64: 1, 1, 128>}, {transform_indices = @transform_4, window_bounds = array<i64: 1, 16, 128>}]} {
    %c0 = arith.constant 0 : index
    %c0_0 = arith.constant 0 : index
    %c0_1 = arith.constant 0 : index
    %0 = vector.load %arg3[%c0, %c0_0, %c0_1] : memref<1x16x32xf32, #tpu.memory_space<vmem>>, vector<1x16x32xf32>
    %1 = vector.shape_cast %0 : vector<1x16x32xf32> to vector<16x32xf32>
    %c0_2 = arith.constant 0 : index
    %c0_3 = arith.constant 0 : index
    %c0_4 = arith.constant 0 : index
    %2 = vector.load %arg4[%c0_2, %c0_3, %c0_4] : memref<1x128x32xf32, #tpu.memory_space<vmem>>, vector<1x128x32xf32>
    %3 = vector.shape_cast %2 : vector<1x128x32xf32> to vector<128x32xf32>
    %cst = arith.constant dense<0.000000e+00> : vector<16x128xf32>
    %4 = tpu.matmul %1, %3, %cst {dimension_numbers = #tpu.dot_dimension_numbers<[1], [1], [0], [0], [0, 0, 1, 0], [], []>} : vector<16x32xf32>, vector<128x32xf32>, vector<16x128xf32> -> vector<16x128xf32>
    %c0_5 = arith.constant 0 : index
    %c0_6 = arith.constant 0 : index
    %c0_7 = arith.constant 0 : index
    %5 = vector.load %arg5[%c0_5, %c0_6, %c0_7] : memref<1x1x128xi32, #tpu.memory_space<vmem>>, vector<1x1x128xi32>
    %6 = vector.shape_cast %5 : vector<1x1x128xi32> to vector<1x128xi32>
    %c0_i32 = arith.constant 0 : i32
    %7 = vector.broadcast %c0_i32 : i32 to vector<1x128xi32>
    %8 = arith.cmpi ne, %6, %7 : vector<1x128xi32>
    %cst_8 = arith.constant -9.99999971E-10 : f32
    %9 = vector.shape_cast %8 : vector<1x128xi1> to vector<1x128xi1>
    %10 = vector.broadcast %9 : vector<1x128xi1> to vector<16x128xi1>
    %11 = vector.broadcast %cst_8 : f32 to vector<16x128xf32>
    %12 = arith.select %10, %11, %4 : vector<16x128xi1>, vector<16x128xf32>
    %c0_9 = arith.constant 0 : index
    %c0_10 = arith.constant 0 : index
    %c0_11 = arith.constant 0 : index
    %13 = vector.load %arg6[%c0_9, %c0_10, %c0_11] : memref<1x16x128xf32, #tpu.memory_space<vmem>>, vector<1x16x128xf32>
    %14 = vector.shape_cast %13 : vector<1x16x128xf32> to vector<16x128xf32>
    %15 = vector.shape_cast %12 : vector<16x128xf32> to vector<1x16x128xf32>
    tpu.vector_store %arg6[%c0_9, %c0_10, %c0_11], %15 {strides = array<i32>} : memref<1x16x128xf32, #tpu.memory_space<vmem>>, vector<1x16x128xf32>,
    return
  }
  func.func @transform_0(%arg0: i32, %arg1: i32) -> i32 {
    %c0_i32 = arith.constant 0 : i32
    %c0_i32_0 = arith.constant 0 : i32
    return %c0_i32 : i32
  }
  func.func @transform_1(%arg0: i32, %arg1: i32) -> (i32, i32, i32) {
    %c0_i32 = arith.constant 0 : i32
    %c0_i32_0 = arith.constant 0 : i32
    return %arg0, %arg1, %c0_i32 : i32, i32, i32
  }
  func.func @transform_2(%arg0: i32, %arg1: i32) -> (i32, i32, i32) {
    %c0_i32 = arith.constant 0 : i32
    %c0_i32_0 = arith.constant 0 : i32
    %c0_i32_1 = arith.constant 0 : i32
    return %arg0, %c0_i32, %c0_i32_0 : i32, i32, i32
  }
  func.func @transform_3(%arg0: i32, %arg1: i32) -> (i32, i32, i32) {
    %c0_i32 = arith.constant 0 : i32
    %c0_i32_0 = arith.constant 0 : i32
    %c0_i32_1 = arith.constant 0 : i32
    return %arg0, %c0_i32, %c0_i32_0 : i32, i32, i32
  }
  func.func @transform_4(%arg0: i32, %arg1: i32) -> (i32, i32, i32) {
    %c0_i32 = arith.constant 0 : i32
    %c0_i32_0 = arith.constant 0 : i32
    return %arg0, %arg1, %c0_i32 : i32, i32, i32
  }
}

</mosaic_0001>

<llo_original>
// kernel: tpu_custom_call.1
$region0: #{tpu_custom_call.1}
  #allocation0 [shape = 'u32[]', space=smem, size = 0x4, offset = 0x4, fixed_abs, tag = 'smem constant byte address 0x4 - core index']
  #allocation1 [shape = 'u32[144,128]{1,0:T(1,128)}', space=vmem, size = 0x12000, scoped, tag = 'internal scratch']
  #allocation2 [shape = 'f32[128,32]{1,0:T(8,128)}', space=vmem, size = 0x10000, scoped, tag = 'scratch operand']
  #allocation3 [shape = 'f32[1]{0:T(128)S(6)}', space=smem, size = 0x200, scoped, tag = 'scoped memory for tpu_custom_call.1']
  %s0 = inlined_call_operand.<no memory space> [shape: f32[1], index: 0, kind: input, shape index: {}]
  %s1 = inlined_call_operand.vmem [shape: f32[2,16,32], index: 1, kind: input, shape index: {}]
  %s2 = inlined_call_operand.vmem [shape: f32[2,128,32], index: 2, kind: input, shape index: {}]
  %s3 = inlined_call_operand.vmem [shape: s32[2,1,128], index: 3, kind: input, shape index: {}]
  %s4 = inlined_call_operand.hbm [shape: f32[2,16,128], index: 4, kind: output, shape index: {}]
  %s5 = sld [smem:[#allocation0]]
  $region49: #{tpu_custom_call.1} parent=0
    _
  %s7 = ssub.s32 1, %s5
  %s8 = scalar_select 0, %s7, %s5
  %9 = sst [smem:[#allocation3]] %s0
  $region1: #{tpu_custom_call.1} parent=0
    #allocation4 [shape = 'u8[16384]{0}', space=vmem, size = 0x4000, scoped, tag = 'output window, operand 0']
    #allocation5 [shape = 's32[2]{0}', space=sflag, size = 0x8, scoped, tag = 'scoped memory for tpu_custom_call.1']
    %10 = vsyncpa [#allocation5], 0
    %s11 = scalar_lea.sflag [#allocation5], 1
    %12 = vsyncpa %s11, 0
    loop: start=0, step=1, limit=4
    $region2: #{tpu_custom_call.1} parent=1 // loop_pre_header
      _
    $region3: #{tpu_custom_call.1} parent=1 // loop_header
      %s14 = sphi 0, %s18
      %p15 = scmp.ge.s32.totalorder %s14, 4
      %s21 = sphi 0, %s33
      %s22 = sphi 0, %s29
      %s23 = sphi 0, %s21
      %s24 = sphi 0, %s22
      %s25 = sphi 0, %s23
      %s26 = sphi 0, %s24
      %s34 = sphi 0, %s34
      %s36 = sphi 0, %s34
      %s37 = sphi 0, %s36
      %s51 = sphi 0, %s37
      %s59 = sphi 0, %s61
      %s62 = sphi 0, %s59
      %s63 = sphi 0, %s62
      %s79 = sphi 0, %s63
      %s85 = sphi 0, %s87
      %s88 = sphi 0, %s85
      %s89 = sphi 0, %s88
      %s105 = sphi 0, %s89
      %s111 = sphi 0, %s113
      %s114 = sphi 0, %s111
      %s115 = sphi 0, %s114
      %s131 = sphi 0, %s115
      %s139 = sphi 0, %s141
      %s142 = sphi 0, %s139
      %s143 = sphi 0, %s142
      %s159 = sphi 0, %s143
    $region4: #{tpu_custom_call.1} parent=1 // loop_header_branch
      %17 = sbr.rel (%p15) target = $region8
    $region5: #{tpu_custom_call.1} parent=1 // loop_body
      %s19 = ssub.s32 %s14, 1
      %s20 = ssub.s32 %s14, 2
      %s27 = sadd.s32 1, %s22
      %p28 = scmp.ge.s32.totalorder %s27, 1
      %s29 = scalar_select %p28, 0, %s27
      %s30 = sadd.s32 1, %s21
      %s31 = scalar_select %p28, %s30, %s21
      %p32 = scmp.ge.s32.totalorder %s31, 2
      %s33 = scalar_select %p32, 0, %s31
      %s35 = sadd.s32 %s34, 1
      %p38 = scmp.eq.s32.totalorder %s14, 1
      %p39 = scmp.ne.s32.totalorder %s34, %s36
      %p40 = scmp.eq.s32.totalorder %s14, 0
      %p41 = por %p39, %p40
      %p42 = scmp.ne.s32.totalorder %s34, %s36
      %p43 = scmp.eq.s32.totalorder %s19, 1
      %p44 = por %p42, %p43
      %p45 = scmp.ne.s32.totalorder %s36, %s37
      %p46 = scmp.eq.s32.totalorder %s19, 0
      %p47 = por %p45, %p46
      %p48 = scmp.ne.s32.totalorder %s36, %s37
      %p49 = scmp.eq.s32.totalorder %s20, 1
      %p50 = por %p48, %p49
      %p52 = scmp.ne.s32.totalorder %s37, %s51
      %p53 = scmp.eq.s32.totalorder %s20, 0
      %p54 = por %p52, %p53
      %s55 = ssub.s32 %s21, %s33
      %s56 = ssub.s32 %s22, %s29
      %s57 = sor.u32 %s55, %s56
      %p58 = scmp.eq.s32.totalorder %s57, 0
      %s60 = sadd.s32 %s59, 1
      %s61 = scalar_select %p58, %s59, %s60
      %p64 = pneg %p58
      %p65 = scmp.eq.s32.totalorder %s14, 1
      %p66 = por %p64, %p65
      %p67 = scmp.ne.s32.totalorder %s59, %s62
      %p68 = scmp.eq.s32.totalorder %s14, 0
      %p69 = por %p67, %p68
      %p70 = scmp.ne.s32.totalorder %s59, %s62
      %p71 = scmp.eq.s32.totalorder %s19, 1
      %p72 = por %p70, %p71
      %p73 = scmp.ne.s32.totalorder %s62, %s63
      %p74 = scmp.eq.s32.totalorder %s19, 0
      %p75 = por %p73, %p74
      %p76 = scmp.ne.s32.totalorder %s62, %s63
      %p77 = scmp.eq.s32.totalorder %s20, 1
      %p78 = por %p76, %p77
      %p80 = scmp.ne.s32.totalorder %s63, %s79
      %p81 = scmp.eq.s32.totalorder %s20, 0
      %p82 = por %p80, %p81
      %s83 = ssub.s32 %s21, %s33
      %p84 = scmp.eq.s32.totalorder %s83, 0
      %s86 = sadd.s32 %s85, 1
      %s87 = scalar_select %p84, %s85, %s86
      %p90 = pneg %p84
      %p91 = scmp.eq.s32.totalorder %s14, 1
      %p92 = por %p90, %p91
      %p93 = scmp.ne.s32.totalorder %s85, %s88
      %p94 = scmp.eq.s32.totalorder %s14, 0
      %p95 = por %p93, %p94
      %p96 = scmp.ne.s32.totalorder %s85, %s88
      %p97 = scmp.eq.s32.totalorder %s19, 1
      %p98 = por %p96, %p97
      %p99 = scmp.ne.s32.totalorder %s88, %s89
      %p100 = scmp.eq.s32.totalorder %s19, 0
      %p101 = por %p99, %p100
      %p102 = scmp.ne.s32.totalorder %s88, %s89
      %p103 = scmp.eq.s32.totalorder %s20, 1
      %p104 = por %p102, %p103
      %p106 = scmp.ne.s32.totalorder %s89, %s105
      %p107 = scmp.eq.s32.totalorder %s20, 0
      %p108 = por %p106, %p107
      %s109 = ssub.s32 %s21, %s33
      %p110 = scmp.eq.s32.totalorder %s109, 0
      %s112 = sadd.s32 %s111, 1
      %s113 = scalar_select %p110, %s111, %s112
      %p116 = pneg %p110
      %p117 = scmp.eq.s32.totalorder %s14, 1
      %p118 = por %p116, %p117
      %p119 = scmp.ne.s32.totalorder %s111, %s114
      %p120 = scmp.eq.s32.totalorder %s14, 0
      %p121 = por %p119, %p120
      %p122 = scmp.ne.s32.totalorder %s111, %s114
      %p123 = scmp.eq.s32.totalorder %s19, 1
      %p124 = por %p122, %p123
      %p125 = scmp.ne.s32.totalorder %s114, %s115
      %p126 = scmp.eq.s32.totalorder %s19, 0
      %p127 = por %p125, %p126
      %p128 = scmp.ne.s32.totalorder %s114, %s115
      %p129 = scmp.eq.s32.totalorder %s20, 1
      %p130 = por %p128, %p129
      %p132 = scmp.ne.s32.totalorder %s115, %s131
      %p133 = scmp.eq.s32.totalorder %s20, 0
      %p134 = por %p132, %p133
      %s135 = ssub.s32 %s21, %s33
      %s136 = ssub.s32 %s22, %s29
      %s137 = sor.u32 %s135, %s136
      %p138 = scmp.eq.s32.totalorder %s137, 0
      %s140 = sadd.s32 %s139, 1
      %s141 = scalar_select %p138, %s139, %s140
      %p144 = pneg %p138
      %p145 = scmp.eq.s32.totalorder %s14, 1
      %p146 = por %p144, %p145
      %p147 = scmp.ne.s32.totalorder %s139, %s142
      %p148 = scmp.eq.s32.totalorder %s14, 0
      %p149 = por %p147, %p148
      %p150 = scmp.ne.s32.totalorder %s139, %s142
      %p151 = scmp.eq.s32.totalorder %s19, 1
      %p152 = por %p150, %p151
      %p153 = scmp.ne.s32.totalorder %s142, %s143
      %p154 = scmp.eq.s32.totalorder %s19, 0
      %p155 = por %p153, %p154
      %p156 = scmp.ne.s32.totalorder %s142, %s143
      %p157 = scmp.eq.s32.totalorder %s20, 1
      %p158 = por %p156, %p157
      %p160 = scmp.ne.s32.totalorder %s143, %s159
      %p161 = scmp.eq.s32.totalorder %s20, 0
      %p162 = por %p160, %p161
      %p163 = scmp.le.s32.totalorder 1, %s14
      %p164 = scmp.lt.s32.totalorder %s14, 3
      %p165 = pnand %p163, %p164
      %p166 = pneg %p165
      // Predicated region
      $region9: #{tpu_custom_call.1} parent=5 // pred_check
        _
      $region10: #{tpu_custom_call.1} parent=5 // pred_check_branch
        %168 = sbr.rel (%p165) target = $region12
      $region11: #{tpu_custom_call.1} parent=5 // pred_region
        %s169 = ssub.s32 %s14, 1
        // Predicated region
        $region13: #{tpu_custom_call.1} parent=11 // pred_check
          %p170 = pneg %p47
        $region14: #{tpu_custom_call.1} parent=11 // pred_check_branch
          %172 = sbr.rel (%p170) target = $region16
        $region15: #{tpu_custom_call.1} parent=11 // pred_region
          _
        $region16: #{tpu_custom_call.1} parent=11 // pred_fallthru
          _
      $region12: #{tpu_custom_call.1} parent=5 // pred_fallthru
        _
      %p173 = scmp.lt.s32.totalorder %s14, 2
      // Predicated region
      $region17: #{tpu_custom_call.1} parent=5 // pred_check
        %p174 = pneg %p173
      $region18: #{tpu_custom_call.1} parent=5 // pred_check_branch
        %176 = sbr.rel (%p174) target = $region20
      $region19: #{tpu_custom_call.1} parent=5 // pred_region
        // Predicated region
        $region21: #{tpu_custom_call.1} parent=19 // pred_check
          %p177 = pneg %p69
        $region22: #{tpu_custom_call.1} parent=19 // pred_check_branch
          %179 = sbr.rel (%p177) target = $region24
        $region23: #{tpu_custom_call.1} parent=19 // pred_region
          %s180 = smul.u32 2, %s22
          %p181 = scmp.lt.s32.totalorder %s21, 1
          %s182 = scalar_select %p181, %s21, 1
          %p183 = scmp.lt.s32.totalorder %s180, 1
          %s184 = scalar_select %p183, %s180, 1
          %s185 = smul.addr %s182, 2
          %s186 = sadd.s32 %s184, %s185
          %s187 = smul.addr %s186, 8
          %s188 = scalar_lea.vmem %s1, %s187
          %s189 = smul.u32 2, %s22
        $region24: #{tpu_custom_call.1} parent=19 // pred_fallthru
          _
        // Predicated region
        $region25: #{tpu_custom_call.1} parent=19 // pred_check
          %p190 = pneg %p95
        $region26: #{tpu_custom_call.1} parent=19 // pred_check_branch
          %192 = sbr.rel (%p190) target = $region28
        $region27: #{tpu_custom_call.1} parent=19 // pred_region
          %p193 = scmp.lt.s32.totalorder %s21, 1
          %s194 = scalar_select %p193, %s21, 1
          %s195 = smul.addr %s194, 16
          %s196 = smul.addr %s195, 8
          %s197 = scalar_lea.vmem %s2, %s196
        $region28: #{tpu_custom_call.1} parent=19 // pred_fallthru
          _
        // Predicated region
        $region29: #{tpu_custom_call.1} parent=19 // pred_check
          %p198 = pneg %p121
        $region30: #{tpu_custom_call.1} parent=19 // pred_check_branch
          %200 = sbr.rel (%p198) target = $region32
        $region31: #{tpu_custom_call.1} parent=19 // pred_region
          %p201 = scmp.lt.s32.totalorder %s21, 1
          %s202 = scalar_select %p201, %s21, 1
          %s203 = scalar_lea.vmem %s3, %s202
        $region32: #{tpu_custom_call.1} parent=19 // pred_fallthru
          _
      $region20: #{tpu_custom_call.1} parent=5 // pred_fallthru
        _
      %p204 = scmp.le.s32.totalorder 1, %s14
      %p205 = scmp.lt.s32.totalorder %s14, 3
      %p206 = pnand %p204, %p205
      %p207 = pneg %p206
      // Predicated region
      $region33: #{tpu_custom_call.1} parent=5 // pred_check
        _
      $region34: #{tpu_custom_call.1} parent=5 // pred_check_branch
        %209 = sbr.rel (%p206) target = $region36
      $region35: #{tpu_custom_call.1} parent=5 // pred_region
        %s210 = ssub.s32 %s14, 1
        %p211 = pneg %p47
        %p212 = pneg %p44
        %s213 = smul.u32 2, %s24
        %p214 = scmp.lt.s32.totalorder %s23, 1
        %s215 = scalar_select %p214, %s23, 1
        %p216 = scmp.lt.s32.totalorder %s213, 1
        %s217 = scalar_select %p216, %s213, 1
        %s218 = smul.addr %s215, 2
        %s219 = sadd.s32 %s217, %s218
        %s220 = smul.addr %s219, 8
        %s221 = scalar_lea.vmem %s1, %s220
        %p222 = pneg %p75
        %p223 = pneg %p72
        %p224 = scmp.lt.s32.totalorder %s23, 1
        %s225 = scalar_select %p224, %s23, 1
        %s226 = smul.addr %s225, 16
        %s227 = smul.addr %s226, 8
        %s228 = scalar_lea.vmem %s2, %s227
        %p229 = pneg %p101
        %p230 = pneg %p98
        %p231 = scmp.lt.s32.totalorder %s23, 1
        %s232 = scalar_select %p231, %s23, 1
        %s233 = scalar_lea.vmem %s3, %s232
        %p234 = pneg %p127
        %p235 = pneg %p124
        %p236 = pneg %p155
        %p237 = pneg %p152
        %s238 = sand.u32 %s142, 1
        %s239 = scalar_lea.sflag [#allocation5], %s238
        %s240 = sand.u32 %s142, 1
        %s241 = smul.addr %s240, 16
        %s242 = scalar_lea.vmem [#allocation4], %s241
        %s243 = smul.u32 2, %s24
        %p244 = scmp.lt.s32.totalorder %s23, 1
        %s245 = scalar_select %p244, %s23, 1
        %p246 = scmp.lt.s32.totalorder %s243, 1
        %s247 = scalar_select %p246, %s243, 1
        %s248 = smul.addr %s245, 2
        %s249 = sadd.s32 %s247, %s248
        %s250 = smul.addr %s249, 8
        %s251 = scalar_lea.vmem %s1, %s250
        %s252 = smul.u32 2, %s24
        %p253 = scmp.lt.s32.totalorder %s23, 1
        %s254 = scalar_select %p253, %s23, 1
        %s255 = smul.addr %s254, 16
        %s256 = smul.addr %s255, 8
        %s257 = scalar_lea.vmem %s2, %s256
        %p258 = scmp.lt.s32.totalorder %s23, 1
        %s259 = scalar_select %p258, %s23, 1
        %s260 = scalar_lea.vmem %s3, %s259
        %s261 = smul.u32 2, %s24
        %v262 = vld [vmem:[%s251] sm:$0xff]
        %v263 = vld [vmem:[%s251 + $0x8] sm:$0xff]
        %v264 = vld [vmem:[%s257] sm:$0xff]
        %v265 = vld [vmem:[%s257 + $0x8] sm:$0xff]
        %v266 = vld [vmem:[%s257 + $0x10] sm:$0xff]
        %v267 = vld [vmem:[%s257 + $0x18] sm:$0xff]
        %v268 = vld [vmem:[%s257 + $0x20] sm:$0xff]
        %v269 = vld [vmem:[%s257 + $0x28] sm:$0xff]
        %v270 = vld [vmem:[%s257 + $0x30] sm:$0xff]
        %v271 = vld [vmem:[%s257 + $0x38] sm:$0xff]
        %v272 = vld [vmem:[%s257 + $0x40] sm:$0xff]
        %v273 = vld [vmem:[%s257 + $0x48] sm:$0xff]
        %v274 = vld [vmem:[%s257 + $0x50] sm:$0xff]
        %v275 = vld [vmem:[%s257 + $0x58] sm:$0xff]
        %v276 = vld [vmem:[%s257 + $0x60] sm:$0xff]
        %v277 = vld [vmem:[%s257 + $0x68] sm:$0xff]
        %v278 = vld [vmem:[%s257 + $0x70] sm:$0xff]
        %v279 = vld [vmem:[%s257 + $0x78] sm:$0xff]
        %vm280 = vcmask 261120
        %v282 = vsel %vm280, %v262, 0
        %v285 = vsel %vm280, %v263, 0
        %v288 = vsel %vm280, %v264, 0
        %v291 = vsel %vm280, %v265, 0
        %v294 = vsel %vm280, %v266, 0
        %v297 = vsel %vm280, %v267, 0
        %v300 = vsel %vm280, %v268, 0
        %v303 = vsel %vm280, %v269, 0
        %v306 = vsel %vm280, %v270, 0
        %v309 = vsel %vm280, %v271, 0
        %v312 = vsel %vm280, %v272, 0
        %v315 = vsel %vm280, %v273, 0
        %v318 = vsel %vm280, %v274, 0
        %v321 = vsel %vm280, %v275, 0
        %v324 = vsel %vm280, %v276, 0
        %v327 = vsel %vm280, %v277, 0
        %v330 = vsel %vm280, %v278, 0
        %v333 = vsel %vm280, %v279, 0
        %335 = vmatprep.subr.mxu0 0.0
        %336 = vmatpush1.xpose.msra.mxu0 %v288
        %337 = vmatprep.subr.mxu0 0.0
        %338 = vmatpush1.xpose.msra.mxu0 %v291
        %339 = vmatprep.subr.mxu0 0.0
        %340 = vmatpush1.xpose.msra.mxu0 %v294
        %341 = vmatprep.subr.mxu0 0.0
        %342 = vmatpush1.xpose.msra.mxu0 %v297
        %343 = vmatprep.subr.mxu0 0.0
        %344 = vmatpush1.xpose.msra.mxu0 %v300
        %345 = vmatprep.subr.mxu0 0.0
        %346 = vmatpush1.xpose.msra.mxu0 %v303
        %347 = vmatprep.subr.mxu0 0.0
        %348 = vmatpush1.xpose.msra.mxu0 %v306
        %349 = vmatprep.subr.mxu0 0.0
        %350 = vmatpush1.xpose.msra.mxu0 %v309
        %351 = vmatprep.subr.mxu0 0.0
        %352 = vmatpush1.xpose.msra.mxu0 %v312
        %353 = vmatprep.subr.mxu0 0.0
        %354 = vmatpush1.xpose.msra.mxu0 %v315
        %355 = vmatprep.subr.mxu0 0.0
        %356 = vmatpush1.xpose.msra.mxu0 %v318
        %357 = vmatprep.subr.mxu0 0.0
        %358 = vmatpush1.xpose.msra.mxu0 %v321
        %359 = vmatprep.subr.mxu0 0.0
        %360 = vmatpush1.xpose.msra.mxu0 %v324
        %361 = vmatprep.subr.mxu0 0.0
        %362 = vmatpush1.xpose.msra.mxu0 %v327
        %363 = vmatprep.subr.mxu0 0.0
        %364 = vmatpush1.xpose.msra.mxu0 %v330
        %365 = vmatprep.subr.mxu0 0.0
        %366 = vmatpush1.xpose.msra.mxu0 %v333
        %367 = vmatprep.subr.mxu0 0.0
        %368 = vmatpush1.xpose.msra.mxu0 0.0
        %369 = vmatprep.subr.mxu0 0.0
        %370 = vmatpush1.xpose.msra.mxu0 0.0
        %371 = vmatprep.subr.mxu0 0.0
        %372 = vmatpush1.xpose.msra.mxu0 0.0
        %373 = vmatprep.subr.mxu0 0.0
        %374 = vmatpush1.xpose.msra.mxu0 0.0
        %375 = vmatprep.subr.mxu0 0.0
        %376 = vmatpush1.xpose.msra.mxu0 0.0
        %377 = vmatprep.subr.mxu0 0.0
        %378 = vmatpush1.xpose.msra.mxu0 0.0
        %379 = vmatprep.subr.mxu0 0.0
        %380 = vmatpush1.xpose.msra.mxu0 0.0
        %381 = vmatprep.subr.mxu0 0.0
        %382 = vmatpush1.xpose.msra.mxu0 0.0
        %383 = vmatprep.subr.mxu0 0.0
        %384 = vmatpush1.xpose.msra.mxu0 0.0
        %385 = vmatprep.subr.mxu0 0.0
        %386 = vmatpush1.xpose.msra.mxu0 0.0
        %387 = vmatprep.subr.mxu0 0.0
        %388 = vmatpush1.xpose.msra.mxu0 0.0
        %389 = vmatprep.subr.mxu0 0.0
        %390 = vmatpush1.xpose.msra.mxu0 0.0
        %391 = vmatprep.subr.mxu0 0.0
        %392 = vmatpush1.xpose.msra.mxu0 0.0
        %393 = vmatprep.subr.mxu0 0.0
        %394 = vmatpush1.xpose.msra.mxu0 0.0
        %395 = vmatprep.subr.mxu0 0.0
        %396 = vmatpush1.xpose.msra.mxu0 0.0
        %397 = vmatprep.subr.mxu0 0.0
        %398 = vmatpush1.xpose.msra.mxu0 0.0
        %399 = vmatprep.mubr.f32.mxu0 0.0
        %400 = vmatmul.mubr.f32.gmra.mrb[0].mxu0 %v282
        %v401 = vpop.f32.mrb[0].mxu0
        %v402 = vadd.f32 0.0, %v401
        %v403 = vpop.f32.mrb[0].mxu0
        %404 = vmatprep.mubr.f32.mxu0 0.0
        %405 = vmatmul.mubr.f32.gmra.mrb[0].mxu0 %v285
        %v406 = vpop.f32.mrb[0].mxu0
        %v407 = vadd.f32 0.0, %v406
        %v408 = vpop.f32.mrb[0].mxu0
        %409 = vdwg.mxu0
        %v410 = vld [vmem:[%s260] sm:$0x1]
        %vm411 = vcmp.ne.s32.totalorder %v410, 0
        %v412 = vsel %vm411, 1, 0
        %v413 = vlaneseq
        %v414 = vshrl.u32 %v413, 7
        %v415 = vsub.s32 0, %v414
        %v416 = vrot.slane %v412, %v415
        %vm417 = vcmp.eq.s32.totalorder %v416, 1
        %v418 = vsel %vm417, -1e-09, %v402
        %v419 = vsel %vm417, -1e-09, %v407
        %420 = vst [vmem:[%s242] sm:$0xff] %v418
        %421 = vst [vmem:[%s242 + $0x8] sm:$0xff] %v419
        %s422 = sand.u32 %s142, 1
        %s423 = scalar_lea.sflag [#allocation5], %s422
        %s424 = sand.u32 %s142, 1
        %s425 = smul.addr %s424, 16
        %s426 = scalar_lea.vmem [#allocation4], %s425
        // Predicated region
        $region37: #{tpu_custom_call.1} parent=35 // pred_check
          %p427 = pneg %p152
        $region38: #{tpu_custom_call.1} parent=35 // pred_check_branch
          %429 = sbr.rel (%p427) target = $region40
        $region39: #{tpu_custom_call.1} parent=35 // pred_region
          %s430 = smul.u32 2, %s24
          %s432 = ssub.s32 256, 256
          %433 = vsyncadd %s423, %s432
          %s434 = smul.addr %s23, 2
          %s435 = sadd.s32 %s430, %s434
          %s436 = smul.addr %s435, 128
          %s437 = scalar_lea.hbm %s4, %s436
          %s438 = sshll.u32 %s426, 4
          %s439 = int_to_ptr.vmem [resolvable:$true] %s438
          %444 = dma.vmem_to_hbm [thread:$0]  %s439, 256, %s437, %s423, 128, 128, 8
        $region40: #{tpu_custom_call.1} parent=35 // pred_fallthru
          _
      $region36: #{tpu_custom_call.1} parent=5 // pred_fallthru
        _
      %p445 = scmp.le.s32.totalorder 2, %s14
      // Predicated region
      $region41: #{tpu_custom_call.1} parent=5 // pred_check
        %p446 = pneg %p445
      $region42: #{tpu_custom_call.1} parent=5 // pred_check_branch
        %448 = sbr.rel (%p446) target = $region44
      $region43: #{tpu_custom_call.1} parent=5 // pred_region
        %s449 = ssub.s32 %s14, 2
        // Predicated region
        $region45: #{tpu_custom_call.1} parent=43 // pred_check
          %p450 = pneg %p158
        $region46: #{tpu_custom_call.1} parent=43 // pred_check_branch
          %452 = sbr.rel (%p450) target = $region48
        $region47: #{tpu_custom_call.1} parent=43 // pred_region
          %s453 = sand.u32 %s143, 1
          %s454 = scalar_lea.sflag [#allocation5], %s453
          %s455 = sand.u32 %s143, 1
          %s456 = smul.addr %s455, 16
          %s457 = scalar_lea.vmem [#allocation4], %s456
          %458 = dma.done %s454, 256
        $region48: #{tpu_custom_call.1} parent=43 // pred_fallthru
          _
      $region44: #{tpu_custom_call.1} parent=5 // pred_fallthru
        _
    $region6: #{tpu_custom_call.1} parent=1 // loop_footer
      %s18 = sadd.s32 1, %s14
    $region7: #{tpu_custom_call.1} parent=1 // loop_footer_branch
      %13 = sbr.rel target = $region3
    $region8: #{tpu_custom_call.1} parent=1 // loop_exit
      _
    %459 = vsyncpa [#allocation5], 1
    %s460 = scalar_lea.sflag [#allocation5], 1
    %461 = vsyncpa %s460, 1

</llo_original>
